<compile_context>
chip_gen: v5e
topology: v5e:2x2
jax: 0.10.0
libtpu: 0.0.40
codegen_flags: <defaults>
</compile_context>

<pallas_src>
import jax
import jax.numpy as jnp
from jax.experimental import pallas as pl
from jax.experimental.pallas import tpu as pltpu


def _round_up(x, m):
    return ((x + m - 1) // m) * m


def _choose_batch_tile(B, T, E, dtype_bytes=4):
    """Batch-tile size (sublane axis of the input blocks).

    Picks the largest tile whose double-buffered input blocks fit a ~32 MiB
    budget, keeps >= 2 grid tiles for large B (v7x megacore), and rounds to
    hardware-friendly multiples (8 sublanes / 128 lanes for the loss row).
    """
    if B <= 32:
        return _round_up(max(B, 1), 8)
    if B <= 128:
        return 128
    budget = 32 * 1024 * 1024                       # double-buffered input bytes
    per_example = 2 * (T + 1) * E * dtype_bytes     # 2x (pos+neg+u) rows
    cap = max(128, (budget // per_example) // 128 * 128)
    tb = min(2048, cap, _round_up(B, 128))
    # Keep at least two grid steps so both v7x TensorCores get work.
    if _round_up(B, tb) == tb:
        tb = max(128, _round_up((B + 1) // 2, 128))
    return tb


def _skipgram_kernel(u_ref, pos_ref, neg_ref, loss_ref):
    # u_ref:    (TB, E)       center-word embeddings (gather-native layout)
    # pos_ref:  (TB, C, E)    positive-context embeddings
    # neg_ref:  (TB, NK, E)   negative-sample embeddings
    # loss_ref: (1, TB, 1)    per-example loss
    u = u_ref[...].astype(jnp.float32)              # [TB, E]
    tb = u.shape[0]
    n_pos = pos_ref.shape[1]
    n_neg = neg_ref.shape[1]

    def log_sigmoid(x):
        # Numerically stable log(sigmoid(x)) = min(x, 0) - log1p(exp(-|x|)).
        return jnp.minimum(x, 0.0) - jnp.log1p(jnp.exp(-jnp.abs(x)))

    acc = jnp.zeros((tb, 1), jnp.float32)
    # Per-token multiply-add: avoids materializing a [TB, T, E] f32 temporary.
    for t in range(n_pos):
        d = jnp.sum(pos_ref[:, t, :].astype(jnp.float32) * u,
                    axis=-1, keepdims=True)         # [TB, 1]
        acc = acc + log_sigmoid(d)
    for t in range(n_neg):
        d = jnp.sum(neg_ref[:, t, :].astype(jnp.float32) * u,
                    axis=-1, keepdims=True)         # [TB, 1]
        acc = acc + log_sigmoid(-d)

    loss_ref[...] = (-acc).reshape(loss_ref.shape)  # (1, TB, 1)


def skipgram_loss(in_embed_w, out_embed_w, input_labels, pos_labels, neg_labels):
    """Forward pass of EmbeddingModel: per-example negative-sampling loss [B]."""
    B = input_labels.shape[0]
    C = pos_labels.shape[1]
    NK = neg_labels.shape[1]
    E = in_embed_w.shape[1]
    T = C + NK

    TB = _choose_batch_tile(B, T, E)
    Bp = _round_up(B, TB)
    num_tiles = Bp // TB

    pad = Bp - B
    if pad:
        # Pad the tiny int32 label arrays (NOT the gathered f32 embeddings).
        input_labels = jnp.pad(input_labels, ((0, pad),))
        pos_labels = jnp.pad(pos_labels, ((0, pad), (0, 0)))
        neg_labels = jnp.pad(neg_labels, ((0, pad), (0, 0)))

    # Embedding lookups (data-dependent gathers kept in plain JAX).
    # TODO(synk): fuse these gathers into the kernel via scalar-prefetched
    # labels + manual DMA row gathers to drop one more HBM pass.
    in_emb = jnp.take(in_embed_w, input_labels, axis=0)    # [Bp, E]
    pos_emb = jnp.take(out_embed_w, pos_labels, axis=0)    # [Bp, C, E]
    neg_emb = jnp.take(out_embed_w, neg_labels, axis=0)    # [Bp, NK, E]

    loss3 = pl.pallas_call(
        _skipgram_kernel,
        out_shape=jax.ShapeDtypeStruct((num_tiles, TB, 1), jnp.float32),
        grid=(num_tiles,),
        in_specs=[
            pl.BlockSpec((TB, E), lambda i: (i, 0)),
            pl.BlockSpec((TB, C, E), lambda i: (i, 0, 0)),
            pl.BlockSpec((TB, NK, E), lambda i: (i, 0, 0)),
        ],
        out_specs=pl.BlockSpec((1, TB, 1), lambda i: (i, 0, 0)),
        compiler_params=pltpu.CompilerParams(
            dimension_semantics=("parallel",),
            vmem_limit_bytes=48 * 1024 * 1024),
    )(in_emb, pos_emb, neg_emb)

    return loss3.reshape(Bp)[:B]


def _reference_loss(in_embed_w, out_embed_w, input_labels, pos_labels, neg_labels):
    in_emb = in_embed_w[input_labels]              # [B, E]
    pos_emb = out_embed_w[pos_labels]              # [B, C, E]
    neg_emb = out_embed_w[neg_labels]              # [B, NK, E]
    pos_dot = jnp.einsum("bce,be->bc", pos_emb, in_emb)
    neg_dot = jnp.einsum("bne,be->bn", -neg_emb, in_emb)
    log_pos = jax.nn.log_sigmoid(pos_dot).sum(1)
    log_neg = jax.nn.log_sigmoid(neg_dot).sum(1)
    return -(log_pos + log_neg)


if __name__ == "__main__":
    vocab_size = 50
    embed_size = 32
    batch = 8
    n_pos = 4          # context window size (2 * window)
    n_neg = 8          # negative samples per example

    key = jax.random.PRNGKey(0)
    k_in, k_out, k_il, k_pl, k_nl = jax.random.split(key, 5)

    initrange = 0.5 / embed_size
    in_embed_w = jax.random.uniform(
        k_in, (vocab_size, embed_size), jnp.float32, -initrange, initrange)
    out_embed_w = jax.random.uniform(
        k_out, (vocab_size, embed_size), jnp.float32, -initrange, initrange)

    input_labels = jax.random.randint(k_il, (batch,), 0, vocab_size, jnp.int32)
    pos_labels = jax.random.randint(k_pl, (batch, n_pos), 0, vocab_size, jnp.int32)
    neg_labels = jax.random.randint(k_nl, (batch, n_neg), 0, vocab_size, jnp.int32)

    loss = skipgram_loss(in_embed_w, out_embed_w,
                         input_labels, pos_labels, neg_labels)
    loss = jax.block_until_ready(loss)

    ref = _reference_loss(in_embed_w, out_embed_w,
                          input_labels, pos_labels, neg_labels)
    assert loss.shape == (batch,)
    assert jnp.allclose(loss, ref, atol=1e-5, rtol=1e-5), (loss, ref)

    print("KERNEL_OK")
</pallas_src>

<mosaic_0001>
module attributes {stable_mosaic.version = 11 : i64} {
  func.func @_skipgram_kernel(%arg0: i32, %arg1: memref<8x32xf32, #tpu.memory_space<vmem>>, %arg2: memref<8x4x32xf32, #tpu.memory_space<vmem>>, %arg3: memref<8x8x32xf32, #tpu.memory_space<vmem>>, %arg4: memref<1x8x1xf32, #tpu.memory_space<vmem>>) attributes {dimension_semantics = [#tpu.dimension_semantics<parallel>], iteration_bounds = array<i64: 1>, scalar_prefetch = 0 : i64, scratch_operands = 0 : i64, tpu.core_type = #tpu.core_type<tc>, window_params = [{transform_indices = @transform_0, window_bounds = array<i64: 8, 32>}, {transform_indices = @transform_1, window_bounds = array<i64: 8, 4, 32>}, {transform_indices = @transform_2, window_bounds = array<i64: 8, 8, 32>}, {transform_indices = @transform_3, window_bounds = array<i64: 1, 8, 1>}]} {
    %c0 = arith.constant 0 : index
    %c0_0 = arith.constant 0 : index
    %0 = vector.load %arg1[%c0, %c0_0] : memref<8x32xf32, #tpu.memory_space<vmem>>, vector<8x32xf32>
    %cst = arith.constant 0.000000e+00 : f32
    %1 = vector.broadcast %cst : f32 to vector<8x1xf32>
    %c0_1 = arith.constant 0 : index
    %c0_2 = arith.constant 0 : index
    %c0_3 = arith.constant 0 : index
    %2 = vector.load %arg2[%c0_1, %c0_2, %c0_3] : memref<8x4x32xf32, #tpu.memory_space<vmem>>, vector<8x1x32xf32>
    %3 = vector.shape_cast %2 : vector<8x1x32xf32> to vector<8x32xf32>
    %4 = arith.mulf %3, %0 : vector<8x32xf32>
    %cst_4 = arith.constant dense<0.000000e+00> : vector<8xf32>
    %5 = vector.multi_reduction <add>, %4, %cst_4 [1] : vector<8x32xf32> to vector<8xf32>
    %6 = vector.shape_cast %5 : vector<8xf32> to vector<8x1xf32>
    %cst_5 = arith.constant 0.000000e+00 : f32
    %7 = vector.broadcast %cst_5 : f32 to vector<8x1xf32>
    %8 = arith.minimumf %6, %7 : vector<8x1xf32>
    %9 = math.absf %6 : vector<8x1xf32>
    %cst_6 = arith.constant 0.000000e+00 : f32
    %10 = vector.broadcast %cst_6 : f32 to vector<8x1xf32>
    %11 = arith.subf %10, %9 : vector<8x1xf32>
    %12 = math.exp %11 : vector<8x1xf32>
    %13 = math.log1p %12 : vector<8x1xf32>
    %14 = arith.subf %8, %13 : vector<8x1xf32>
    %15 = arith.addf %1, %14 : vector<8x1xf32>
    %c0_7 = arith.constant 0 : index
    %c1 = arith.constant 1 : index
    %c0_8 = arith.constant 0 : index
    %16 = vector.load %arg2[%c0_7, %c1, %c0_8] : memref<8x4x32xf32, #tpu.memory_space<vmem>>, vector<8x1x32xf32>
    %17 = vector.shape_cast %16 : vector<8x1x32xf32> to vector<8x32xf32>
    %18 = arith.mulf %17, %0 : vector<8x32xf32>
    %cst_9 = arith.constant dense<0.000000e+00> : vector<8xf32>
    %19 = vector.multi_reduction <add>, %18, %cst_9 [1] : vector<8x32xf32> to vector<8xf32>
    %20 = vector.shape_cast %19 : vector<8xf32> to vector<8x1xf32>
    %cst_10 = arith.constant 0.000000e+00 : f32
    %21 = vector.broadcast %cst_10 : f32 to vector<8x1xf32>
    %22 = arith.minimumf %20, %21 : vector<8x1xf32>
    %23 = math.absf %20 : vector<8x1xf32>
    %cst_11 = arith.constant 0.000000e+00 : f32
    %24 = vector.broadcast %cst_11 : f32 to vector<8x1xf32>
    %25 = arith.subf %24, %23 : vector<8x1xf32>
    %26 = math.exp %25 : vector<8x1xf32>
    %27 = math.log1p %26 : vector<8x1xf32>
    %28 = arith.subf %22, %27 : vector<8x1xf32>
    %29 = arith.addf %15, %28 : vector<8x1xf32>
    %c0_12 = arith.constant 0 : index
    %c2 = arith.constant 2 : index
    %c0_13 = arith.constant 0 : index
    %30 = vector.load %arg2[%c0_12, %c2, %c0_13] : memref<8x4x32xf32, #tpu.memory_space<vmem>>, vector<8x1x32xf32>
    %31 = vector.shape_cast %30 : vector<8x1x32xf32> to vector<8x32xf32>
    %32 = arith.mulf %31, %0 : vector<8x32xf32>
    %cst_14 = arith.constant dense<0.000000e+00> : vector<8xf32>
    %33 = vector.multi_reduction <add>, %32, %cst_14 [1] : vector<8x32xf32> to vector<8xf32>
    %34 = vector.shape_cast %33 : vector<8xf32> to vector<8x1xf32>
    %cst_15 = arith.constant 0.000000e+00 : f32
    %35 = vector.broadcast %cst_15 : f32 to vector<8x1xf32>
    %36 = arith.minimumf %34, %35 : vector<8x1xf32>
    %37 = math.absf %34 : vector<8x1xf32>
    %cst_16 = arith.constant 0.000000e+00 : f32
    %38 = vector.broadcast %cst_16 : f32 to vector<8x1xf32>
    %39 = arith.subf %38, %37 : vector<8x1xf32>
    %40 = math.exp %39 : vector<8x1xf32>
    %41 = math.log1p %40 : vector<8x1xf32>
    %42 = arith.subf %36, %41 : vector<8x1xf32>
    %43 = arith.addf %29, %42 : vector<8x1xf32>
    %c0_17 = arith.constant 0 : index
    %c3 = arith.constant 3 : index
    %c0_18 = arith.constant 0 : index
    %44 = vector.load %arg2[%c0_17, %c3, %c0_18] : memref<8x4x32xf32, #tpu.memory_space<vmem>>, vector<8x1x32xf32>
    %45 = vector.shape_cast %44 : vector<8x1x32xf32> to vector<8x32xf32>
    %46 = arith.mulf %45, %0 : vector<8x32xf32>
    %cst_19 = arith.constant dense<0.000000e+00> : vector<8xf32>
    %47 = vector.multi_reduction <add>, %46, %cst_19 [1] : vector<8x32xf32> to vector<8xf32>
    %48 = vector.shape_cast %47 : vector<8xf32> to vector<8x1xf32>
    %cst_20 = arith.constant 0.000000e+00 : f32
    %49 = vector.broadcast %cst_20 : f32 to vector<8x1xf32>
    %50 = arith.minimumf %48, %49 : vector<8x1xf32>
    %51 = math.absf %48 : vector<8x1xf32>
    %cst_21 = arith.constant 0.000000e+00 : f32
    %52 = vector.broadcast %cst_21 : f32 to vector<8x1xf32>
    %53 = arith.subf %52, %51 : vector<8x1xf32>
    %54 = math.exp %53 : vector<8x1xf32>
    %55 = math.log1p %54 : vector<8x1xf32>
    %56 = arith.subf %50, %55 : vector<8x1xf32>
    %57 = arith.addf %43, %56 : vector<8x1xf32>
    %c0_22 = arith.constant 0 : index
    %c0_23 = arith.constant 0 : index
    %c0_24 = arith.constant 0 : index
    %58 = vector.load %arg3[%c0_22, %c0_23, %c0_24] : memref<8x8x32xf32, #tpu.memory_space<vmem>>, vector<8x1x32xf32>
    %59 = vector.shape_cast %58 : vector<8x1x32xf32> to vector<8x32xf32>
    %60 = arith.mulf %59, %0 : vector<8x32xf32>
    %cst_25 = arith.constant dense<0.000000e+00> : vector<8xf32>
    %61 = vector.multi_reduction <add>, %60, %cst_25 [1] : vector<8x32xf32> to vector<8xf32>
    %62 = vector.shape_cast %61 : vector<8xf32> to vector<8x1xf32>
    %cst_26 = arith.constant 0.000000e+00 : f32
    %63 = vector.broadcast %cst_26 : f32 to vector<8x1xf32>
    %64 = arith.subf %63, %62 : vector<8x1xf32>
    %cst_27 = arith.constant 0.000000e+00 : f32
    %65 = vector.broadcast %cst_27 : f32 to vector<8x1xf32>
    %66 = arith.minimumf %64, %65 : vector<8x1xf32>
    %67 = math.absf %64 : vector<8x1xf32>
    %cst_28 = arith.constant 0.000000e+00 : f32
    %68 = vector.broadcast %cst_28 : f32 to vector<8x1xf32>
    %69 = arith.subf %68, %67 : vector<8x1xf32>
    %70 = math.exp %69 : vector<8x1xf32>
    %71 = math.log1p %70 : vector<8x1xf32>
    %72 = arith.subf %66, %71 : vector<8x1xf32>
    %73 = arith.addf %57, %72 : vector<8x1xf32>
    %c0_29 = arith.constant 0 : index
    %c1_30 = arith.constant 1 : index
    %c0_31 = arith.constant 0 : index
    %74 = vector.load %arg3[%c0_29, %c1_30, %c0_31] : memref<8x8x32xf32, #tpu.memory_space<vmem>>, vector<8x1x32xf32>
    %75 = vector.shape_cast %74 : vector<8x1x32xf32> to vector<8x32xf32>
    %76 = arith.mulf %75, %0 : vector<8x32xf32>
    %cst_32 = arith.constant dense<0.000000e+00> : vector<8xf32>
    %77 = vector.multi_reduction <add>, %76, %cst_32 [1] : vector<8x32xf32> to vector<8xf32>
    %78 = vector.shape_cast %77 : vector<8xf32> to vector<8x1xf32>
    %cst_33 = arith.constant 0.000000e+00 : f32
    %79 = vector.broadcast %cst_33 : f32 to vector<8x1xf32>
    %80 = arith.subf %79, %78 : vector<8x1xf32>
    %cst_34 = arith.constant 0.000000e+00 : f32
    %81 = vector.broadcast %cst_34 : f32 to vector<8x1xf32>
    %82 = arith.minimumf %80, %81 : vector<8x1xf32>
    %83 = math.absf %80 : vector<8x1xf32>
    %cst_35 = arith.constant 0.000000e+00 : f32
    %84 = vector.broadcast %cst_35 : f32 to vector<8x1xf32>
    %85 = arith.subf %84, %83 : vector<8x1xf32>
    %86 = math.exp %85 : vector<8x1xf32>
    %87 = math.log1p %86 : vector<8x1xf32>
    %88 = arith.subf %82, %87 : vector<8x1xf32>
    %89 = arith.addf %73, %88 : vector<8x1xf32>
    %c0_36 = arith.constant 0 : index
    %c2_37 = arith.constant 2 : index
    %c0_38 = arith.constant 0 : index
    %90 = vector.load %arg3[%c0_36, %c2_37, %c0_38] : memref<8x8x32xf32, #tpu.memory_space<vmem>>, vector<8x1x32xf32>
    %91 = vector.shape_cast %90 : vector<8x1x32xf32> to vector<8x32xf32>
    %92 = arith.mulf %91, %0 : vector<8x32xf32>
    %cst_39 = arith.constant dense<0.000000e+00> : vector<8xf32>
    %93 = vector.multi_reduction <add>, %92, %cst_39 [1] : vector<8x32xf32> to vector<8xf32>
    %94 = vector.shape_cast %93 : vector<8xf32> to vector<8x1xf32>
    %cst_40 = arith.constant 0.000000e+00 : f32
    %95 = vector.broadcast %cst_40 : f32 to vector<8x1xf32>
    %96 = arith.subf %95, %94 : vector<8x1xf32>
    %cst_41 = arith.constant 0.000000e+00 : f32
    %97 = vector.broadcast %cst_41 : f32 to vector<8x1xf32>
    %98 = arith.minimumf %96, %97 : vector<8x1xf32>
    %99 = math.absf %96 : vector<8x1xf32>
    %cst_42 = arith.constant 0.000000e+00 : f32
    %100 = vector.broadcast %cst_42 : f32 to vector<8x1xf32>
    %101 = arith.subf %100, %99 : vector<8x1xf32>
    %102 = math.exp %101 : vector<8x1xf32>
    %103 = math.log1p %102 : vector<8x1xf32>
    %104 = arith.subf %98, %103 : vector<8x1xf32>
    %105 = arith.addf %89, %104 : vector<8x1xf32>
    %c0_43 = arith.constant 0 : index
    %c3_44 = arith.constant 3 : index
    %c0_45 = arith.constant 0 : index
    %106 = vector.load %arg3[%c0_43, %c3_44, %c0_45] : memref<8x8x32xf32, #tpu.memory_space<vmem>>, vector<8x1x32xf32>
    %107 = vector.shape_cast %106 : vector<8x1x32xf32> to vector<8x32xf32>
    %108 = arith.mulf %107, %0 : vector<8x32xf32>
    %cst_46 = arith.constant dense<0.000000e+00> : vector<8xf32>
    %109 = vector.multi_reduction <add>, %108, %cst_46 [1] : vector<8x32xf32> to vector<8xf32>
    %110 = vector.shape_cast %109 : vector<8xf32> to vector<8x1xf32>
    %cst_47 = arith.constant 0.000000e+00 : f32
    %111 = vector.broadcast %cst_47 : f32 to vector<8x1xf32>
    %112 = arith.subf %111, %110 : vector<8x1xf32>
    %cst_48 = arith.constant 0.000000e+00 : f32
    %113 = vector.broadcast %cst_48 : f32 to vector<8x1xf32>
    %114 = arith.minimumf %112, %113 : vector<8x1xf32>
    %115 = math.absf %112 : vector<8x1xf32>
    %cst_49 = arith.constant 0.000000e+00 : f32
    %116 = vector.broadcast %cst_49 : f32 to vector<8x1xf32>
    %117 = arith.subf %116, %115 : vector<8x1xf32>
    %118 = math.exp %117 : vector<8x1xf32>
    %119 = math.log1p %118 : vector<8x1xf32>
    %120 = arith.subf %114, %119 : vector<8x1xf32>
    %121 = arith.addf %105, %120 : vector<8x1xf32>
    %c0_50 = arith.constant 0 : index
    %c4 = arith.constant 4 : index
    %c0_51 = arith.constant 0 : index
    %122 = vector.load %arg3[%c0_50, %c4, %c0_51] : memref<8x8x32xf32, #tpu.memory_space<vmem>>, vector<8x1x32xf32>
    %123 = vector.shape_cast %122 : vector<8x1x32xf32> to vector<8x32xf32>
    %124 = arith.mulf %123, %0 : vector<8x32xf32>
    %cst_52 = arith.constant dense<0.000000e+00> : vector<8xf32>
    %125 = vector.multi_reduction <add>, %124, %cst_52 [1] : vector<8x32xf32> to vector<8xf32>
    %126 = vector.shape_cast %125 : vector<8xf32> to vector<8x1xf32>
    %cst_53 = arith.constant 0.000000e+00 : f32
    %127 = vector.broadcast %cst_53 : f32 to vector<8x1xf32>
    %128 = arith.subf %127, %126 : vector<8x1xf32>
    %cst_54 = arith.constant 0.000000e+00 : f32
    %129 = vector.broadcast %cst_54 : f32 to vector<8x1xf32>
    %130 = arith.minimumf %128, %129 : vector<8x1xf32>
    %131 = math.absf %128 : vector<8x1xf32>
    %cst_55 = arith.constant 0.000000e+00 : f32
    %132 = vector.broadcast %cst_55 : f32 to vector<8x1xf32>
    %133 = arith.subf %132, %131 : vector<8x1xf32>
    %134 = math.exp %133 : vector<8x1xf32>
    %135 = math.log1p %134 : vector<8x1xf32>
    %136 = arith.subf %130, %135 : vector<8x1xf32>
    %137 = arith.addf %121, %136 : vector<8x1xf32>
    %c0_56 = arith.constant 0 : index
    %c5 = arith.constant 5 : index
    %c0_57 = arith.constant 0 : index
    %138 = vector.load %arg3[%c0_56, %c5, %c0_57] : memref<8x8x32xf32, #tpu.memory_space<vmem>>, vector<8x1x32xf32>
    %139 = vector.shape_cast %138 : vector<8x1x32xf32> to vector<8x32xf32>
    %140 = arith.mulf %139, %0 : vector<8x32xf32>
    %cst_58 = arith.constant dense<0.000000e+00> : vector<8xf32>
    %141 = vector.multi_reduction <add>, %140, %cst_58 [1] : vector<8x32xf32> to vector<8xf32>
    %142 = vector.shape_cast %141 : vector<8xf32> to vector<8x1xf32>
    %cst_59 = arith.constant 0.000000e+00 : f32
    %143 = vector.broadcast %cst_59 : f32 to vector<8x1xf32>
    %144 = arith.subf %143, %142 : vector<8x1xf32>
    %cst_60 = arith.constant 0.000000e+00 : f32
    %145 = vector.broadcast %cst_60 : f32 to vector<8x1xf32>
    %146 = arith.minimumf %144, %145 : vector<8x1xf32>
    %147 = math.absf %144 : vector<8x1xf32>
    %cst_61 = arith.constant 0.000000e+00 : f32
    %148 = vector.broadcast %cst_61 : f32 to vector<8x1xf32>
    %149 = arith.subf %148, %147 : vector<8x1xf32>
    %150 = math.exp %149 : vector<8x1xf32>
    %151 = math.log1p %150 : vector<8x1xf32>
    %152 = arith.subf %146, %151 : vector<8x1xf32>
    %153 = arith.addf %137, %152 : vector<8x1xf32>
    %c0_62 = arith.constant 0 : index
    %c6 = arith.constant 6 : index
    %c0_63 = arith.constant 0 : index
    %154 = vector.load %arg3[%c0_62, %c6, %c0_63] : memref<8x8x32xf32, #tpu.memory_space<vmem>>, vector<8x1x32xf32>
    %155 = vector.shape_cast %154 : vector<8x1x32xf32> to vector<8x32xf32>
    %156 = arith.mulf %155, %0 : vector<8x32xf32>
    %cst_64 = arith.constant dense<0.000000e+00> : vector<8xf32>
    %157 = vector.multi_reduction <add>, %156, %cst_64 [1] : vector<8x32xf32> to vector<8xf32>
    %158 = vector.shape_cast %157 : vector<8xf32> to vector<8x1xf32>
    %cst_65 = arith.constant 0.000000e+00 : f32
    %159 = vector.broadcast %cst_65 : f32 to vector<8x1xf32>
    %160 = arith.subf %159, %158 : vector<8x1xf32>
    %cst_66 = arith.constant 0.000000e+00 : f32
    %161 = vector.broadcast %cst_66 : f32 to vector<8x1xf32>
    %162 = arith.minimumf %160, %161 : vector<8x1xf32>
    %163 = math.absf %160 : vector<8x1xf32>
    %cst_67 = arith.constant 0.000000e+00 : f32
    %164 = vector.broadcast %cst_67 : f32 to vector<8x1xf32>
    %165 = arith.subf %164, %163 : vector<8x1xf32>
    %166 = math.exp %165 : vector<8x1xf32>
    %167 = math.log1p %166 : vector<8x1xf32>
    %168 = arith.subf %162, %167 : vector<8x1xf32>
    %169 = arith.addf %153, %168 : vector<8x1xf32>
    %c0_68 = arith.constant 0 : index
    %c7 = arith.constant 7 : index
    %c0_69 = arith.constant 0 : index
    %170 = vector.load %arg3[%c0_68, %c7, %c0_69] : memref<8x8x32xf32, #tpu.memory_space<vmem>>, vector<8x1x32xf32>
    %171 = vector.shape_cast %170 : vector<8x1x32xf32> to vector<8x32xf32>
    %172 = arith.mulf %171, %0 : vector<8x32xf32>
    %cst_70 = arith.constant dense<0.000000e+00> : vector<8xf32>
    %173 = vector.multi_reduction <add>, %172, %cst_70 [1] : vector<8x32xf32> to vector<8xf32>
    %174 = vector.shape_cast %173 : vector<8xf32> to vector<8x1xf32>
    %cst_71 = arith.constant 0.000000e+00 : f32
    %175 = vector.broadcast %cst_71 : f32 to vector<8x1xf32>
    %176 = arith.subf %175, %174 : vector<8x1xf32>
    %cst_72 = arith.constant 0.000000e+00 : f32
    %177 = vector.broadcast %cst_72 : f32 to vector<8x1xf32>
    %178 = arith.minimumf %176, %177 : vector<8x1xf32>
    %179 = math.absf %176 : vector<8x1xf32>
    %cst_73 = arith.constant 0.000000e+00 : f32
    %180 = vector.broadcast %cst_73 : f32 to vector<8x1xf32>
    %181 = arith.subf %180, %179 : vector<8x1xf32>
    %182 = math.exp %181 : vector<8x1xf32>
    %183 = math.log1p %182 : vector<8x1xf32>
    %184 = arith.subf %178, %183 : vector<8x1xf32>
    %185 = arith.addf %169, %184 : vector<8x1xf32>
    %cst_74 = arith.constant 0.000000e+00 : f32
    %186 = vector.broadcast %cst_74 : f32 to vector<8x1xf32>
    %187 = arith.subf %186, %185 : vector<8x1xf32>
    %188 = vector.shape_cast %187 : vector<8x1xf32> to vector<1x8x1xf32>
    %c0_75 = arith.constant 0 : index
    %c0_76 = arith.constant 0 : index
    %c0_77 = arith.constant 0 : index
    %189 = vector.load %arg4[%c0_75, %c0_76, %c0_77] : memref<1x8x1xf32, #tpu.memory_space<vmem>>, vector<1x8x1xf32>
    tpu.vector_store %arg4[%c0_75, %c0_76, %c0_77], %188 {strides = array<i32>} : memref<1x8x1xf32, #tpu.memory_space<vmem>>, vector<1x8x1xf32>,
    return
  }
  func.func @transform_0(%arg0: i32) -> (i32, i32) {
    %c0_i32 = arith.constant 0 : i32
    %c0_i32_0 = arith.constant 0 : i32
    return %arg0, %c0_i32 : i32, i32
  }
  func.func @transform_1(%arg0: i32) -> (i32, i32, i32) {
    %c0_i32 = arith.constant 0 : i32
    %c0_i32_0 = arith.constant 0 : i32
    %c0_i32_1 = arith.constant 0 : i32
    return %arg0, %c0_i32, %c0_i32_0 : i32, i32, i32
  }
  func.func @transform_2(%arg0: i32) -> (i32, i32, i32) {
    %c0_i32 = arith.constant 0 : i32
    %c0_i32_0 = arith.constant 0 : i32
    %c0_i32_1 = arith.constant 0 : i32
    return %arg0, %c0_i32, %c0_i32_0 : i32, i32, i32
  }
  func.func @transform_3(%arg0: i32) -> (i32, i32, i32) {
    %c0_i32 = arith.constant 0 : i32
    %c0_i32_0 = arith.constant 0 : i32
    %c0_i32_1 = arith.constant 0 : i32
    return %arg0, %c0_i32, %c0_i32_0 : i32, i32, i32
  }
}

</mosaic_0001>

<llo_original>
// kernel: tpu_custom_call.1
$region0: #{tpu_custom_call.1}
  #allocation0 [shape = 'u32[]', space=smem, size = 0x4, offset = 0x4, fixed_abs, tag = 'smem constant byte address 0x4 - core index']
  #allocation1 [shape = 'u32[72,128]{1,0:T(1,128)}', space=vmem, size = 0x9000, scoped, tag = 'internal scratch']
  %s0 = inlined_call_operand.hbm [shape: f32[8,32], index: 0, kind: input, shape index: {}]
  %s1 = inlined_call_operand.hbm [shape: f32[8,4,32], index: 1, kind: input, shape index: {}]
  %s2 = inlined_call_operand.hbm [shape: f32[8,8,32], index: 2, kind: input, shape index: {}]
  %s3 = inlined_call_operand.vmem [shape: f32[1,8,1], index: 3, kind: output, shape index: {}]
  %s4 = sld [smem:[#allocation0]]
  $region34: #{tpu_custom_call.1} parent=0
    _
  %s6 = ssub.s32 1, %s4
  %s7 = scalar_select 0, %s6, %s4
  $region1: #{tpu_custom_call.1} parent=0
    #allocation2 [shape = 'u8[4096]{0}', space=vmem, size = 0x1000, scoped, tag = 'input window, operand 0, single buffered']
    #allocation3 [shape = 's32[1]{0}', space=sflag, size = 0x4, scoped, tag = 'scoped memory for tpu_custom_call.1']
    #allocation4 [shape = 'u8[16384]{0}', space=vmem, size = 0x4000, scoped, tag = 'input window, operand 1, single buffered']
    #allocation5 [shape = 's32[1]{0}', space=sflag, size = 0x4, scoped, tag = 'scoped memory for tpu_custom_call.1']
    #allocation6 [shape = 'u8[32768]{0}', space=vmem, size = 0x8000, scoped, tag = 'input window, operand 2, single buffered']
    %8 = vsyncpa [#allocation3], 0
    %9 = vsyncpa [#allocation5], 0
    // Predicated region
    $region2: #{tpu_custom_call.1} parent=1 // pred_check
      _
    $region3: #{tpu_custom_call.1} parent=1 // pred_check_branch
      %11 = sbr.rel (0) target = $region5
    $region4: #{tpu_custom_call.1} parent=1 // pred_region
      %13 = vsyncadd [#allocation3], 0
      %s15 = sshll.u32 %s0, 4
      %s16 = int_to_ptr.hbm [resolvable:$true] %s15
      %s17 = sshll.u32 [#allocation2], 4
      %s18 = int_to_ptr.vmem [resolvable:$true] %s17
      %20 = dma.hbm_to_vmem [thread:$0]  %s16, 128, %s18, [#allocation3]
    $region5: #{tpu_custom_call.1} parent=1 // pred_fallthru
      _
    // Predicated region
    $region6: #{tpu_custom_call.1} parent=1 // pred_check
      _
    $region7: #{tpu_custom_call.1} parent=1 // pred_check_branch
      %22 = sbr.rel (0) target = $region9
    $region8: #{tpu_custom_call.1} parent=1 // pred_region
      %24 = vsyncadd [#allocation5], 0
      %s25 = sshll.u32 %s1, 4
      %s26 = int_to_ptr.hbm [resolvable:$true] %s25
      %s27 = sshll.u32 [#allocation4], 4
      %s28 = int_to_ptr.vmem [resolvable:$true] %s27
      %33 = dma.hbm_to_vmem [thread:$0]  %s26, 512, %s28, [#allocation5], 64, 64, 4
    $region9: #{tpu_custom_call.1} parent=1 // pred_fallthru
      _
    // Predicated region
    $region10: #{tpu_custom_call.1} parent=1 // pred_check
      _
    $region11: #{tpu_custom_call.1} parent=1 // pred_check_branch
      %35 = sbr.rel (0) target = $region13
    $region12: #{tpu_custom_call.1} parent=1 // pred_region
      %37 = vsyncadd [#allocation5], 0
      %s38 = sshll.u32 %s2, 4
      %s39 = int_to_ptr.hbm [resolvable:$true] %s38
      %s40 = sshll.u32 [#allocation6], 4
      %s41 = int_to_ptr.vmem [resolvable:$true] %s40
      %46 = dma.hbm_to_vmem [thread:$0]  %s39, 1024, %s41, [#allocation5], 128, 128, 8
    $region13: #{tpu_custom_call.1} parent=1 // pred_fallthru
      _
    // Predicated region
    $region14: #{tpu_custom_call.1} parent=1 // pred_check
      _
    $region15: #{tpu_custom_call.1} parent=1 // pred_check_branch
      %48 = sbr.rel (0) target = $region17
    $region16: #{tpu_custom_call.1} parent=1 // pred_region
      %50 = dma.done [#allocation3], 128
    $region17: #{tpu_custom_call.1} parent=1 // pred_fallthru
      _
    // Predicated region
    $region18: #{tpu_custom_call.1} parent=1 // pred_check
      _
    $region19: #{tpu_custom_call.1} parent=1 // pred_check_branch
      %52 = sbr.rel (0) target = $region21
    $region20: #{tpu_custom_call.1} parent=1 // pred_region
      %54 = dma.done [#allocation5], 512
    $region21: #{tpu_custom_call.1} parent=1 // pred_fallthru
      _
    // Predicated region
    $region22: #{tpu_custom_call.1} parent=1 // pred_check
      _
    $region23: #{tpu_custom_call.1} parent=1 // pred_check_branch
      %56 = sbr.rel (0) target = $region25
    $region24: #{tpu_custom_call.1} parent=1 // pred_region
      %58 = dma.done [#allocation5], 1024
    $region25: #{tpu_custom_call.1} parent=1 // pred_fallthru
      _
    %v59 = vld [vmem:[#allocation2] sm:$0xff]
    %v60 = vld [vmem:[#allocation4] sm:$0x1]
    %v61 = vld [vmem:[#allocation4 + $0x4] sm:$0x1]
    %v62 = vld [vmem:[#allocation4 + $0x8] sm:$0x1]
    %v63 = vld [vmem:[#allocation4 + $0xc] sm:$0x1]
    %v64 = vld [vmem:[#allocation4 + $0x10] sm:$0x1]
    %v65 = vld [vmem:[#allocation4 + $0x14] sm:$0x1]
    %v66 = vld [vmem:[#allocation4 + $0x18] sm:$0x1]
    %v67 = vld [vmem:[#allocation4 + $0x1c] sm:$0x1]
    %v69 = vrot.slane %v59, 1
    %v70 = vrot.slane %v59, 2
    %v71 = vrot.slane %v59, 3
    %v72 = vrot.slane %v59, 4
    %v73 = vrot.slane %v59, 5
    %v74 = vrot.slane %v59, 6
    %v75 = vrot.slane %v59, 7
    %v84 = vmul.f32 %v60, %v59
    %v85 = vmul.f32 %v61, %v69
    %v86 = vmul.f32 %v62, %v70
    %v87 = vmul.f32 %v63, %v71
    %v88 = vmul.f32 %v64, %v72
    %v89 = vmul.f32 %v65, %v73
    %v90 = vmul.f32 %v66, %v74
    %v91 = vmul.f32 %v67, %v75
    %v100 = vrot.slane %v85, 7
    %vm101 = vcmask 1041409
    %v102 = vsel %vm101, %v100, %v84
    %v103 = vrot.slane %v86, 6
    %vm104 = vcmask 1042434
    %v105 = vsel %vm104, %v103, %v102
    %v106 = vrot.slane %v87, 5
    %vm107 = vcmask 1043459
    %v108 = vsel %vm107, %v106, %v105
    %v109 = vrot.slane %v88, 4
    %vm110 = vcmask 1044484
    %v111 = vsel %vm110, %v109, %v108
    %v112 = vrot.slane %v89, 3
    %vm113 = vcmask 1045509
    %v114 = vsel %vm113, %v112, %v111
    %v115 = vrot.slane %v90, 2
    %vm116 = vcmask 1046534
    %v117 = vsel %vm116, %v115, %v114
    %v118 = vrot.slane %v91, 1
    %vm119 = vcmask 1047559
    %v120 = vsel %vm119, %v118, %v117
    %vm122 = vcmask 261120
    %v123 = vsel %vm122, %v120, 0.0
    %124 = vadd.xlane.f32.xlu0 %v123
    %v125 = vpop.xlane.xlu0 %124
    %v126 = vmin.f32 %v125, 0.0
    %v127 = vand.u32 2147483647, %v125
    %v128 = vsub.f32 0.0, %v127
    %v129 = vmul.f32 %v128, 1.442695
    %v130 = vpow.pop %v129
    %v131 = vadd.f32 %v130, 1.0
    %v132 = vlog2.pop %v131
    %v133 = vmul.f32 %v132, 0.6931472
    %v134 = vmul.f32 -0.5, %v130
    %v135 = vadd.f32 %v134, 1.0
    %v136 = vmul.f32 %v135, %v130
    %v137 = vand.u32 2147483647, %v130
    %vm138 = vcmp.lt.f32.partialorder %v137, 0.0004427343
    %v139 = vsel %vm138, %v136, %v133
    %v140 = vsub.f32 %v126, %v139
    %v141 = vadd.f32 %v140, 0.0
    %v142 = vld [vmem:[#allocation4 + $0x1] sm:$0x1]
    %v143 = vld [vmem:[#allocation4 + $0x5] sm:$0x1]
    %v144 = vld [vmem:[#allocation4 + $0x9] sm:$0x1]
    %v145 = vld [vmem:[#allocation4 + $0xd] sm:$0x1]
    %v146 = vld [vmem:[#allocation4 + $0x11] sm:$0x1]
    %v147 = vld [vmem:[#allocation4 + $0x15] sm:$0x1]
    %v148 = vld [vmem:[#allocation4 + $0x19] sm:$0x1]
    %v149 = vld [vmem:[#allocation4 + $0x1d] sm:$0x1]
    %v150 = vmul.f32 %v142, %v59
    %v151 = vmul.f32 %v143, %v69
    %v152 = vmul.f32 %v144, %v70
    %v153 = vmul.f32 %v145, %v71
    %v154 = vmul.f32 %v146, %v72
    %v155 = vmul.f32 %v147, %v73
    %v156 = vmul.f32 %v148, %v74
    %v157 = vmul.f32 %v149, %v75
    %v166 = vrot.slane %v151, 7
    %v167 = vsel %vm101, %v166, %v150
    %v168 = vrot.slane %v152, 6
    %v169 = vsel %vm104, %v168, %v167
    %v170 = vrot.slane %v153, 5
    %v171 = vsel %vm107, %v170, %v169
    %v172 = vrot.slane %v154, 4
    %v173 = vsel %vm110, %v172, %v171
    %v174 = vrot.slane %v155, 3
    %v175 = vsel %vm113, %v174, %v173
    %v176 = vrot.slane %v156, 2
    %v177 = vsel %vm116, %v176, %v175
    %v178 = vrot.slane %v157, 1
    %v179 = vsel %vm119, %v178, %v177
    %v181 = vsel %vm122, %v179, 0.0
    %182 = vadd.xlane.f32.xlu0 %v181
    %v183 = vpop.xlane.xlu0 %182
    %v184 = vmin.f32 %v183, 0.0
    %v185 = vand.u32 2147483647, %v183
    %v186 = vsub.f32 0.0, %v185
    %v187 = vmul.f32 %v186, 1.442695
    %v188 = vpow.pop %v187
    %v189 = vadd.f32 %v188, 1.0
    %v190 = vlog2.pop %v189
    %v191 = vmul.f32 %v190, 0.6931472
    %v192 = vmul.f32 -0.5, %v188
    %v193 = vadd.f32 %v192, 1.0
    %v194 = vmul.f32 %v193, %v188
    %v195 = vand.u32 2147483647, %v188
    %vm196 = vcmp.lt.f32.partialorder %v195, 0.0004427343
    %v197 = vsel %vm196, %v194, %v191
    %v198 = vsub.f32 %v184, %v197
    %v199 = vadd.f32 %v141, %v198
    %v200 = vld [vmem:[#allocation4 + $0x2] sm:$0x1]
    %v201 = vld [vmem:[#allocation4 + $0x6] sm:$0x1]
    %v202 = vld [vmem:[#allocation4 + $0xa] sm:$0x1]
    %v203 = vld [vmem:[#allocation4 + $0xe] sm:$0x1]
    %v204 = vld [vmem:[#allocation4 + $0x12] sm:$0x1]
    %v205 = vld [vmem:[#allocation4 + $0x16] sm:$0x1]
    %v206 = vld [vmem:[#allocation4 + $0x1a] sm:$0x1]
    %v207 = vld [vmem:[#allocation4 + $0x1e] sm:$0x1]
    %v208 = vmul.f32 %v200, %v59
    %v209 = vmul.f32 %v201, %v69
    %v210 = vmul.f32 %v202, %v70
    %v211 = vmul.f32 %v203, %v71
    %v212 = vmul.f32 %v204, %v72
    %v213 = vmul.f32 %v205, %v73
    %v214 = vmul.f32 %v206, %v74
    %v215 = vmul.f32 %v207, %v75
    %v224 = vrot.slane %v209, 7
    %v225 = vsel %vm101, %v224, %v208
    %v226 = vrot.slane %v210, 6
    %v227 = vsel %vm104, %v226, %v225
    %v228 = vrot.slane %v211, 5
    %v229 = vsel %vm107, %v228, %v227
    %v230 = vrot.slane %v212, 4
    %v231 = vsel %vm110, %v230, %v229
    %v232 = vrot.slane %v213, 3
    %v233 = vsel %vm113, %v232, %v231
    %v234 = vrot.slane %v214, 2
    %v235 = vsel %vm116, %v234, %v233
    %v236 = vrot.slane %v215, 1
    %v237 = vsel %vm119, %v236, %v235
    %v239 = vsel %vm122, %v237, 0.0
    %240 = vadd.xlane.f32.xlu0 %v239
    %v241 = vpop.xlane.xlu0 %240
    %v242 = vmin.f32 %v241, 0.0
    %v243 = vand.u32 2147483647, %v241
    %v244 = vsub.f32 0.0, %v243
    %v245 = vmul.f32 %v244, 1.442695
    %v246 = vpow.pop %v245
    %v247 = vadd.f32 %v246, 1.0
    %v248 = vlog2.pop %v247
    %v249 = vmul.f32 %v248, 0.6931472
    %v250 = vmul.f32 -0.5, %v246
    %v251 = vadd.f32 %v250, 1.0
    %v252 = vmul.f32 %v251, %v246
    %v253 = vand.u32 2147483647, %v246
    %vm254 = vcmp.lt.f32.partialorder %v253, 0.0004427343
    %v255 = vsel %vm254, %v252, %v249
    %v256 = vsub.f32 %v242, %v255
    %v257 = vadd.f32 %v199, %v256
    %v258 = vld [vmem:[#allocation4 + $0x3] sm:$0x1]
    %v259 = vld [vmem:[#allocation4 + $0x7] sm:$0x1]
    %v260 = vld [vmem:[#allocation4 + $0xb] sm:$0x1]
    %v261 = vld [vmem:[#allocation4 + $0xf] sm:$0x1]
    %v262 = vld [vmem:[#allocation4 + $0x13] sm:$0x1]
    %v263 = vld [vmem:[#allocation4 + $0x17] sm:$0x1]
    %v264 = vld [vmem:[#allocation4 + $0x1b] sm:$0x1]
    %v265 = vld [vmem:[#allocation4 + $0x1f] sm:$0x1]
    %v266 = vmul.f32 %v258, %v59
    %v267 = vmul.f32 %v259, %v69
    %v268 = vmul.f32 %v260, %v70
    %v269 = vmul.f32 %v261, %v71
    %v270 = vmul.f32 %v262, %v72
    %v271 = vmul.f32 %v263, %v73
    %v272 = vmul.f32 %v264, %v74
    %v273 = vmul.f32 %v265, %v75
    %v282 = vrot.slane %v267, 7
    %v283 = vsel %vm101, %v282, %v266
    %v284 = vrot.slane %v268, 6
    %v285 = vsel %vm104, %v284, %v283
    %v286 = vrot.slane %v269, 5
    %v287 = vsel %vm107, %v286, %v285
    %v288 = vrot.slane %v270, 4
    %v289 = vsel %vm110, %v288, %v287
    %v290 = vrot.slane %v271, 3
    %v291 = vsel %vm113, %v290, %v289
    %v292 = vrot.slane %v272, 2
    %v293 = vsel %vm116, %v292, %v291
    %v294 = vrot.slane %v273, 1
    %v295 = vsel %vm119, %v294, %v293
    %v297 = vsel %vm122, %v295, 0.0
    %298 = vadd.xlane.f32.xlu0 %v297
    %v299 = vpop.xlane.xlu0 %298
    %v300 = vmin.f32 %v299, 0.0
    %v301 = vand.u32 2147483647, %v299
    %v302 = vsub.f32 0.0, %v301
    %v303 = vmul.f32 %v302, 1.442695
    %v304 = vpow.pop %v303
    %v305 = vadd.f32 %v304, 1.0
    %v306 = vlog2.pop %v305
    %v307 = vmul.f32 %v306, 0.6931472
    %v308 = vmul.f32 -0.5, %v304
    %v309 = vadd.f32 %v308, 1.0
    %v310 = vmul.f32 %v309, %v304
    %v311 = vand.u32 2147483647, %v304
    %vm312 = vcmp.lt.f32.partialorder %v311, 0.0004427343
    %v313 = vsel %vm312, %v310, %v307
    %v314 = vsub.f32 %v300, %v313
    %v315 = vadd.f32 %v257, %v314
    %v316 = vld [vmem:[#allocation6] sm:$0x1]
    %v317 = vld [vmem:[#allocation6 + $0x8] sm:$0x1]
    %v318 = vld [vmem:[#allocation6 + $0x10] sm:$0x1]
    %v319 = vld [vmem:[#allocation6 + $0x18] sm:$0x1]
    %v320 = vld [vmem:[#allocation6 + $0x20] sm:$0x1]
    %v321 = vld [vmem:[#allocation6 + $0x28] sm:$0x1]
    %v322 = vld [vmem:[#allocation6 + $0x30] sm:$0x1]
    %v323 = vld [vmem:[#allocation6 + $0x38] sm:$0x1]
    %v324 = vmul.f32 %v316, %v59
    %v325 = vmul.f32 %v317, %v69
    %v326 = vmul.f32 %v318, %v70
    %v327 = vmul.f32 %v319, %v71
    %v328 = vmul.f32 %v320, %v72
    %v329 = vmul.f32 %v321, %v73
    %v330 = vmul.f32 %v322, %v74
    %v331 = vmul.f32 %v323, %v75
    %v340 = vrot.slane %v325, 7
    %v341 = vsel %vm101, %v340, %v324
    %v342 = vrot.slane %v326, 6
    %v343 = vsel %vm104, %v342, %v341
    %v344 = vrot.slane %v327, 5
    %v345 = vsel %vm107, %v344, %v343
    %v346 = vrot.slane %v328, 4
    %v347 = vsel %vm110, %v346, %v345
    %v348 = vrot.slane %v329, 3
    %v349 = vsel %vm113, %v348, %v347
    %v350 = vrot.slane %v330, 2
    %v351 = vsel %vm116, %v350, %v349
    %v352 = vrot.slane %v331, 1
    %v353 = vsel %vm119, %v352, %v351
    %v355 = vsel %vm122, %v353, 0.0
    %356 = vadd.xlane.f32.xlu0 %v355
    %v357 = vpop.xlane.xlu0 %356
    %v358 = vsub.f32 0.0, %v357
    %v359 = vmin.f32 %v358, 0.0
    %v360 = vand.u32 2147483647, %v358
    %v361 = vsub.f32 0.0, %v360
    %v362 = vmul.f32 %v361, 1.442695
    %v363 = vpow.pop %v362
    %v364 = vadd.f32 %v363, 1.0
    %v365 = vlog2.pop %v364
    %v366 = vmul.f32 %v365, 0.6931472
    %v367 = vmul.f32 -0.5, %v363
    %v368 = vadd.f32 %v367, 1.0
    %v369 = vmul.f32 %v368, %v363
    %v370 = vand.u32 2147483647, %v363
    %vm371 = vcmp.lt.f32.partialorder %v370, 0.0004427343
    %v372 = vsel %vm371, %v369, %v366
    %v373 = vsub.f32 %v359, %v372
    %v374 = vadd.f32 %v315, %v373
    %v375 = vld [vmem:[#allocation6 + $0x1] sm:$0x1]
    %v376 = vld [vmem:[#allocation6 + $0x9] sm:$0x1]
    %v377 = vld [vmem:[#allocation6 + $0x11] sm:$0x1]
    %v378 = vld [vmem:[#allocation6 + $0x19] sm:$0x1]
    %v379 = vld [vmem:[#allocation6 + $0x21] sm:$0x1]
    %v380 = vld [vmem:[#allocation6 + $0x29] sm:$0x1]
    %v381 = vld [vmem:[#allocation6 + $0x31] sm:$0x1]
    %v382 = vld [vmem:[#allocation6 + $0x39] sm:$0x1]
    %v383 = vmul.f32 %v375, %v59
    %v384 = vmul.f32 %v376, %v69
    %v385 = vmul.f32 %v377, %v70
    %v386 = vmul.f32 %v378, %v71
    %v387 = vmul.f32 %v379, %v72
    %v388 = vmul.f32 %v380, %v73
    %v389 = vmul.f32 %v381, %v74
    %v390 = vmul.f32 %v382, %v75
    %v399 = vrot.slane %v384, 7
    %v400 = vsel %vm101, %v399, %v383
    %v401 = vrot.slane %v385, 6
    %v402 = vsel %vm104, %v401, %v400
    %v403 = vrot.slane %v386, 5
    %v404 = vsel %vm107, %v403, %v402
    %v405 = vrot.slane %v387, 4
    %v406 = vsel %vm110, %v405, %v404
    %v407 = vrot.slane %v388, 3
    %v408 = vsel %vm113, %v407, %v406
    %v409 = vrot.slane %v389, 2
    %v410 = vsel %vm116, %v409, %v408
    %v411 = vrot.slane %v390, 1
    %v412 = vsel %vm119, %v411, %v410
    %v414 = vsel %vm122, %v412, 0.0
    %415 = vadd.xlane.f32.xlu0 %v414
    %v416 = vpop.xlane.xlu0 %415
    %v417 = vsub.f32 0.0, %v416
    %v418 = vmin.f32 %v417, 0.0
    %v419 = vand.u32 2147483647, %v417
    %v420 = vsub.f32 0.0, %v419
    %v421 = vmul.f32 %v420, 1.442695
    %v422 = vpow.pop %v421
    %v423 = vadd.f32 %v422, 1.0
    %v424 = vlog2.pop %v423
    %v425 = vmul.f32 %v424, 0.6931472
    %v426 = vmul.f32 -0.5, %v422
    %v427 = vadd.f32 %v426, 1.0
    %v428 = vmul.f32 %v427, %v422
    %v429 = vand.u32 2147483647, %v422
    %vm430 = vcmp.lt.f32.partialorder %v429, 0.0004427343
    %v431 = vsel %vm430, %v428, %v425
    %v432 = vsub.f32 %v418, %v431
    %v433 = vadd.f32 %v374, %v432
    %v434 = vld [vmem:[#allocation6 + $0x2] sm:$0x1]
    %v435 = vld [vmem:[#allocation6 + $0xa] sm:$0x1]
    %v436 = vld [vmem:[#allocation6 + $0x12] sm:$0x1]
    %v437 = vld [vmem:[#allocation6 + $0x1a] sm:$0x1]
    %v438 = vld [vmem:[#allocation6 + $0x22] sm:$0x1]
    %v439 = vld [vmem:[#allocation6 + $0x2a] sm:$0x1]
    %v440 = vld [vmem:[#allocation6 + $0x32] sm:$0x1]
    %v441 = vld [vmem:[#allocation6 + $0x3a] sm:$0x1]
    %v442 = vmul.f32 %v434, %v59
    %v443 = vmul.f32 %v435, %v69
    %v444 = vmul.f32 %v436, %v70
    %v445 = vmul.f32 %v437, %v71
    %v446 = vmul.f32 %v438, %v72
    %v447 = vmul.f32 %v439, %v73
    %v448 = vmul.f32 %v440, %v74
    %v449 = vmul.f32 %v441, %v75
    %v458 = vrot.slane %v443, 7
    %v459 = vsel %vm101, %v458, %v442
    %v460 = vrot.slane %v444, 6
    %v461 = vsel %vm104, %v460, %v459
    %v462 = vrot.slane %v445, 5
    %v463 = vsel %vm107, %v462, %v461
    %v464 = vrot.slane %v446, 4
    %v465 = vsel %vm110, %v464, %v463
    %v466 = vrot.slane %v447, 3
    %v467 = vsel %vm113, %v466, %v465
    %v468 = vrot.slane %v448, 2
    %v469 = vsel %vm116, %v468, %v467
    %v470 = vrot.slane %v449, 1
    %v471 = vsel %vm119, %v470, %v469
    %v473 = vsel %vm122, %v471, 0.0
    %474 = vadd.xlane.f32.xlu0 %v473
    %v475 = vpop.xlane.xlu0 %474
    %v476 = vsub.f32 0.0, %v475
    %v477 = vmin.f32 %v476, 0.0
    %v478 = vand.u32 2147483647, %v476
    %v479 = vsub.f32 0.0, %v478
    %v480 = vmul.f32 %v479, 1.442695
    %v481 = vpow.pop %v480
    %v482 = vadd.f32 %v481, 1.0
    %v483 = vlog2.pop %v482
    %v484 = vmul.f32 %v483, 0.6931472
    %v485 = vmul.f32 -0.5, %v481
    %v486 = vadd.f32 %v485, 1.0
    %v487 = vmul.f32 %v486, %v481
    %v488 = vand.u32 2147483647, %v481
    %vm489 = vcmp.lt.f32.partialorder %v488, 0.0004427343
    %v490 = vsel %vm489, %v487, %v484
    %v491 = vsub.f32 %v477, %v490
    %v492 = vadd.f32 %v433, %v491
    %v493 = vld [vmem:[#allocation6 + $0x3] sm:$0x1]
    %v494 = vld [vmem:[#allocation6 + $0xb] sm:$0x1]
    %v495 = vld [vmem:[#allocation6 + $0x13] sm:$0x1]
    %v496 = vld [vmem:[#allocation6 + $0x1b] sm:$0x1]
    %v497 = vld [vmem:[#allocation6 + $0x23] sm:$0x1]
    %v498 = vld [vmem:[#allocation6 + $0x2b] sm:$0x1]
    %v499 = vld [vmem:[#allocation6 + $0x33] sm:$0x1]
    %v500 = vld [vmem:[#allocation6 + $0x3b] sm:$0x1]
    %v501 = vmul.f32 %v493, %v59
    %v502 = vmul.f32 %v494, %v69
    %v503 = vmul.f32 %v495, %v70
    %v504 = vmul.f32 %v496, %v71
    %v505 = vmul.f32 %v497, %v72
    %v506 = vmul.f32 %v498, %v73
    %v507 = vmul.f32 %v499, %v74
    %v508 = vmul.f32 %v500, %v75
    %v517 = vrot.slane %v502, 7
    %v518 = vsel %vm101, %v517, %v501
    %v519 = vrot.slane %v503, 6
    %v520 = vsel %vm104, %v519, %v518
    %v521 = vrot.slane %v504, 5
    %v522 = vsel %vm107, %v521, %v520
    %v523 = vrot.slane %v505, 4
    %v524 = vsel %vm110, %v523, %v522
    %v525 = vrot.slane %v506, 3
    %v526 = vsel %vm113, %v525, %v524
    %v527 = vrot.slane %v507, 2
    %v528 = vsel %vm116, %v527, %v526
    %v529 = vrot.slane %v508, 1
    %v530 = vsel %vm119, %v529, %v528
    %v532 = vsel %vm122, %v530, 0.0
    %533 = vadd.xlane.f32.xlu0 %v532
    %v534 = vpop.xlane.xlu0 %533
    %v535 = vsub.f32 0.0, %v534
    %v536 = vmin.f32 %v535, 0.0
    %v537 = vand.u32 2147483647, %v535
    %v538 = vsub.f32 0.0, %v537
    %v539 = vmul.f32 %v538, 1.442695
    %v540 = vpow.pop %v539
    %v541 = vadd.f32 %v540, 1.0
    %v542 = vlog2.pop %v541
    %v543 = vmul.f32 %v542, 0.6931472
    %v544 = vmul.f32 -0.5, %v540
    %v545 = vadd.f32 %v544, 1.0
    %v546 = vmul.f32 %v545, %v540
    %v547 = vand.u32 2147483647, %v540
    %vm548 = vcmp.lt.f32.partialorder %v547, 0.0004427343
    %v549 = vsel %vm548, %v546, %v543
    %v550 = vsub.f32 %v536, %v549
    %v551 = vadd.f32 %v492, %v550
    %v552 = vld [vmem:[#allocation6 + $0x4] sm:$0x1]
    %v553 = vld [vmem:[#allocation6 + $0xc] sm:$0x1]
    %v554 = vld [vmem:[#allocation6 + $0x14] sm:$0x1]
    %v555 = vld [vmem:[#allocation6 + $0x1c] sm:$0x1]
    %v556 = vld [vmem:[#allocation6 + $0x24] sm:$0x1]
    %v557 = vld [vmem:[#allocation6 + $0x2c] sm:$0x1]
    %v558 = vld [vmem:[#allocation6 + $0x34] sm:$0x1]
    %v559 = vld [vmem:[#allocation6 + $0x3c] sm:$0x1]
    %v560 = vmul.f32 %v552, %v59
    %v561 = vmul.f32 %v553, %v69
    %v562 = vmul.f32 %v554, %v70
    %v563 = vmul.f32 %v555, %v71
    %v564 = vmul.f32 %v556, %v72
    %v565 = vmul.f32 %v557, %v73
    %v566 = vmul.f32 %v558, %v74
    %v567 = vmul.f32 %v559, %v75
    %v576 = vrot.slane %v561, 7
    %v577 = vsel %vm101, %v576, %v560
    %v578 = vrot.slane %v562, 6
    %v579 = vsel %vm104, %v578, %v577
    %v580 = vrot.slane %v563, 5
    %v581 = vsel %vm107, %v580, %v579
    %v582 = vrot.slane %v564, 4
    %v583 = vsel %vm110, %v582, %v581
    %v584 = vrot.slane %v565, 3
    %v585 = vsel %vm113, %v584, %v583
    %v586 = vrot.slane %v566, 2
    %v587 = vsel %vm116, %v586, %v585
    %v588 = vrot.slane %v567, 1
    %v589 = vsel %vm119, %v588, %v587
    %v591 = vsel %vm122, %v589, 0.0
    %592 = vadd.xlane.f32.xlu0 %v591
    %v593 = vpop.xlane.xlu0 %592
    %v594 = vsub.f32 0.0, %v593
    %v595 = vmin.f32 %v594, 0.0
    %v596 = vand.u32 2147483647, %v594
    %v597 = vsub.f32 0.0, %v596
    %v598 = vmul.f32 %v597, 1.442695
    %v599 = vpow.pop %v598
    %v600 = vadd.f32 %v599, 1.0
    %v601 = vlog2.pop %v600
    %v602 = vmul.f32 %v601, 0.6931472
    %v603 = vmul.f32 -0.5, %v599
    %v604 = vadd.f32 %v603, 1.0
    %v605 = vmul.f32 %v604, %v599
    %v606 = vand.u32 2147483647, %v599
    %vm607 = vcmp.lt.f32.partialorder %v606, 0.0004427343
    %v608 = vsel %vm607, %v605, %v602
    %v609 = vsub.f32 %v595, %v608
    %v610 = vadd.f32 %v551, %v609
    %v611 = vld [vmem:[#allocation6 + $0x5] sm:$0x1]
    %v612 = vld [vmem:[#allocation6 + $0xd] sm:$0x1]
    %v613 = vld [vmem:[#allocation6 + $0x15] sm:$0x1]
    %v614 = vld [vmem:[#allocation6 + $0x1d] sm:$0x1]
    %v615 = vld [vmem:[#allocation6 + $0x25] sm:$0x1]
    %v616 = vld [vmem:[#allocation6 + $0x2d] sm:$0x1]
    %v617 = vld [vmem:[#allocation6 + $0x35] sm:$0x1]
    %v618 = vld [vmem:[#allocation6 + $0x3d] sm:$0x1]
    %v619 = vmul.f32 %v611, %v59
    %v620 = vmul.f32 %v612, %v69
    %v621 = vmul.f32 %v613, %v70
    %v622 = vmul.f32 %v614, %v71
    %v623 = vmul.f32 %v615, %v72
    %v624 = vmul.f32 %v616, %v73
    %v625 = vmul.f32 %v617, %v74
    %v626 = vmul.f32 %v618, %v75
    %v635 = vrot.slane %v620, 7
    %v636 = vsel %vm101, %v635, %v619
    %v637 = vrot.slane %v621, 6
    %v638 = vsel %vm104, %v637, %v636
    %v639 = vrot.slane %v622, 5
    %v640 = vsel %vm107, %v639, %v638
    %v641 = vrot.slane %v623, 4
    %v642 = vsel %vm110, %v641, %v640
    %v643 = vrot.slane %v624, 3
    %v644 = vsel %vm113, %v643, %v642
    %v645 = vrot.slane %v625, 2
    %v646 = vsel %vm116, %v645, %v644
    %v647 = vrot.slane %v626, 1
    %v648 = vsel %vm119, %v647, %v646
    %v650 = vsel %vm122, %v648, 0.0
    %651 = vadd.xlane.f32.xlu0 %v650
    %v652 = vpop.xlane.xlu0 %651
    %v653 = vsub.f32 0.0, %v652
    %v654 = vmin.f32 %v653, 0.0
    %v655 = vand.u32 2147483647, %v653
    %v656 = vsub.f32 0.0, %v655
    %v657 = vmul.f32 %v656, 1.442695
    %v658 = vpow.pop %v657
    %v659 = vadd.f32 %v658, 1.0
    %v660 = vlog2.pop %v659
    %v661 = vmul.f32 %v660, 0.6931472
    %v662 = vmul.f32 -0.5, %v658
    %v663 = vadd.f32 %v662, 1.0
    %v664 = vmul.f32 %v663, %v658
    %v665 = vand.u32 2147483647, %v658
    %vm666 = vcmp.lt.f32.partialorder %v665, 0.0004427343
    %v667 = vsel %vm666, %v664, %v661
    %v668 = vsub.f32 %v654, %v667
    %v669 = vadd.f32 %v610, %v668
    %v670 = vld [vmem:[#allocation6 + $0x6] sm:$0x1]
    %v671 = vld [vmem:[#allocation6 + $0xe] sm:$0x1]
    %v672 = vld [vmem:[#allocation6 + $0x16] sm:$0x1]
    %v673 = vld [vmem:[#allocation6 + $0x1e] sm:$0x1]
    %v674 = vld [vmem:[#allocation6 + $0x26] sm:$0x1]
    %v675 = vld [vmem:[#allocation6 + $0x2e] sm:$0x1]
    %v676 = vld [vmem:[#allocation6 + $0x36] sm:$0x1]
    %v677 = vld [vmem:[#allocation6 + $0x3e] sm:$0x1]
    %v678 = vmul.f32 %v670, %v59
    %v679 = vmul.f32 %v671, %v69
    %v680 = vmul.f32 %v672, %v70
    %v681 = vmul.f32 %v673, %v71
    %v682 = vmul.f32 %v674, %v72
    %v683 = vmul.f32 %v675, %v73
    %v684 = vmul.f32 %v676, %v74
    %v685 = vmul.f32 %v677, %v75
    %v694 = vrot.slane %v679, 7
    %v695 = vsel %vm101, %v694, %v678
    %v696 = vrot.slane %v680, 6
    %v697 = vsel %vm104, %v696, %v695
    %v698 = vrot.slane %v681, 5
    %v699 = vsel %vm107, %v698, %v697
    %v700 = vrot.slane %v682, 4
    %v701 = vsel %vm110, %v700, %v699
    %v702 = vrot.slane %v683, 3
    %v703 = vsel %vm113, %v702, %v701
    %v704 = vrot.slane %v684, 2
    %v705 = vsel %vm116, %v704, %v703
    %v706 = vrot.slane %v685, 1
    %v707 = vsel %vm119, %v706, %v705
    %v709 = vsel %vm122, %v707, 0.0
    %710 = vadd.xlane.f32.xlu0 %v709
    %v711 = vpop.xlane.xlu0 %710
    %v712 = vsub.f32 0.0, %v711
    %v713 = vmin.f32 %v712, 0.0
    %v714 = vand.u32 2147483647, %v712
    %v715 = vsub.f32 0.0, %v714
    %v716 = vmul.f32 %v715, 1.442695
    %v717 = vpow.pop %v716
    %v718 = vadd.f32 %v717, 1.0
    %v719 = vlog2.pop %v718
    %v720 = vmul.f32 %v719, 0.6931472
    %v721 = vmul.f32 -0.5, %v717
    %v722 = vadd.f32 %v721, 1.0
    %v723 = vmul.f32 %v722, %v717
    %v724 = vand.u32 2147483647, %v717
    %vm725 = vcmp.lt.f32.partialorder %v724, 0.0004427343
    %v726 = vsel %vm725, %v723, %v720
    %v727 = vsub.f32 %v713, %v726
    %v728 = vadd.f32 %v669, %v727
    %v729 = vld [vmem:[#allocation6 + $0x7] sm:$0x1]
    %v730 = vld [vmem:[#allocation6 + $0xf] sm:$0x1]
    %v731 = vld [vmem:[#allocation6 + $0x17] sm:$0x1]
    %v732 = vld [vmem:[#allocation6 + $0x1f] sm:$0x1]
    %v733 = vld [vmem:[#allocation6 + $0x27] sm:$0x1]
    %v734 = vld [vmem:[#allocation6 + $0x2f] sm:$0x1]
    %v735 = vld [vmem:[#allocation6 + $0x37] sm:$0x1]
    %v736 = vld [vmem:[#allocation6 + $0x3f] sm:$0x1]
    %v737 = vmul.f32 %v729, %v59
    %v738 = vmul.f32 %v730, %v69
    %v739 = vmul.f32 %v731, %v70
    %v740 = vmul.f32 %v732, %v71
    %v741 = vmul.f32 %v733, %v72
    %v742 = vmul.f32 %v734, %v73
    %v743 = vmul.f32 %v735, %v74
    %v744 = vmul.f32 %v736, %v75
    %v753 = vrot.slane %v738, 7
    %v754 = vsel %vm101, %v753, %v737
    %v755 = vrot.slane %v739, 6
    %v756 = vsel %vm104, %v755, %v754
    %v757 = vrot.slane %v740, 5
    %v758 = vsel %vm107, %v757, %v756
    %v759 = vrot.slane %v741, 4
    %v760 = vsel %vm110, %v759, %v758
    %v761 = vrot.slane %v742, 3
    %v762 = vsel %vm113, %v761, %v760
    %v763 = vrot.slane %v743, 2
    %v764 = vsel %vm116, %v763, %v762
    %v765 = vrot.slane %v744, 1
    %v766 = vsel %vm119, %v765, %v764
    %v768 = vsel %vm122, %v766, 0.0
    %769 = vadd.xlane.f32.xlu0 %v768
    %v770 = vpop.xlane.xlu0 %769
    %v771 = vsub.f32 0.0, %v770
    %v772 = vmin.f32 %v771, 0.0
    %v773 = vand.u32 2147483647, %v771
    %v774 = vsub.f32 0.0, %v773
    %v775 = vmul.f32 %v774, 1.442695
    %v776 = vpow.pop %v775
    %v777 = vadd.f32 %v776, 1.0
    %v778 = vlog2.pop %v777
    %v779 = vmul.f32 %v778, 0.6931472
    %v780 = vmul.f32 -0.5, %v776
    %v781 = vadd.f32 %v780, 1.0
    %v782 = vmul.f32 %v781, %v776
    %v783 = vand.u32 2147483647, %v776
    %vm784 = vcmp.lt.f32.partialorder %v783, 0.0004427343
    %v785 = vsel %vm784, %v782, %v779
    %v786 = vsub.f32 %v772, %v785
    %v787 = vadd.f32 %v728, %v786
    %v788 = vsub.f32 0.0, %v787
    %vm789 = vcmask 7168
    %790 = vst.msk [vmem:[%s3] sm:$0xff] %vm789, %v788
    // Predicated region
    $region26: #{tpu_custom_call.1} parent=1 // pred_check
      _
    $region27: #{tpu_custom_call.1} parent=1 // pred_check_branch
      %792 = sbr.rel (0) target = $region29
    $region28: #{tpu_custom_call.1} parent=1 // pred_region
      _
    $region29: #{tpu_custom_call.1} parent=1 // pred_fallthru
      _
    // Predicated region
    $region30: #{tpu_custom_call.1} parent=1 // pred_check
      _
    $region31: #{tpu_custom_call.1} parent=1 // pred_check_branch
      %794 = sbr.rel (0) target = $region33
    $region32: #{tpu_custom_call.1} parent=1 // pred_region
      _
    $region33: #{tpu_custom_call.1} parent=1 // pred_fallthru
      _
    %795 = vsyncpa [#allocation3], 1
    %796 = vsyncpa [#allocation5], 1

</llo_original>
